<compile_context>
chip_gen: v7x
topology: tpu7x:2x2x1
jax: 0.10.0
libtpu: 0.0.40
codegen_flags: <defaults>
</compile_context>

<pallas_src>
import functools
from math import sqrt

import jax
import jax.numpy as jnp
from jax.experimental import pallas as pl
from jax.experimental.pallas import tpu as pltpu


def _round_up(a, b):
    return -(-a // b) * b


def _round_down(a, b):
    return (a // b) * b


# ----------------------------------------------------------------------------
# Kernel body (shared by both layouts).
#   step  = sign(grad_mask) * (eta * alpha)      (sign via explicit compares)
#   adv   = adv + step
#   adv   = max(min(adv, eta), -eta)             (module's clamp(): min then max)
#   lower = amin(x, spatial) ; upper = amax(x, spatial)     per (n, c)
#   adv   = max(min(adv, upper - x), lower - x)
#   x_hat = x + adv
# reduce_axis:  -1 for the (rows, HW) NCHW layout (lane reduce),
#                1 for the (n, HW, C) NHWC layout (sublane reduce).
# ----------------------------------------------------------------------------
def _advgni_kernel(scal_ref, x_ref, g_ref, adv_ref, xhat_ref, adv_out_ref,
                   *, reduce_axis):
    eta = scal_ref[0]        # SMEM scalars: one compiled kernel for any (eta, alpha)
    step = scal_ref[1]       # eta * alpha, pre-folded in the wrapper

    x = x_ref[...]
    g = g_ref[...]
    adv = adv_ref[...]

    # sign() via explicit compares: works for f32 / bf16 / int8 gradient streams
    # without an up-convert (v5e's VPU has no native bf16 path).
    gz = jnp.zeros((), g.dtype)
    sgn = (g > gz).astype(x.dtype) - (g < gz).astype(x.dtype)
    adv = adv + sgn * step

    # clamp(adv, -eta, eta)  == max(min(adv, eta), -eta), exactly the module's clamp()
    adv = jnp.maximum(jnp.minimum(adv, eta), -eta)

    # per-(n, c) spatial min / max  (== x.amin((2,3)) / x.amax((2,3)))
    lower = jnp.min(x, axis=reduce_axis, keepdims=True)
    upper = jnp.max(x, axis=reduce_axis, keepdims=True)

    # clamp so that x + adv stays inside [lower, upper]
    adv = jnp.maximum(jnp.minimum(adv, upper - x), lower - x)

    adv_out_ref[...] = adv.astype(adv_out_ref.dtype)
    xhat_ref[...] = (x + adv).astype(xhat_ref.dtype)


# ----------------------------------------------------------------------------
# Chip-aware tiling knobs (trace-time query; safe fallback if unavailable).
# ----------------------------------------------------------------------------
def _chip_params():
    try:
        info = pltpu.get_tpu_info()
        vmem = int(getattr(info, "vmem_capacity_bytes", 128 << 20))
    except Exception:
        vmem = 128 << 20
    if vmem <= (80 << 20):
        # v7x-class: 64 MiB VMEM, 2 TensorCores -> keep >=2 parallel grid steps.
        return dict(target_bytes=4 << 20, min_bytes=1 << 20, min_steps=4,
                    vmem_cap=48 << 20, two_step_cap=True)
    # v5e / v6e: 128 MiB VMEM, single TensorCore.
    return dict(target_bytes=4 << 20, min_bytes=1 << 20, min_steps=8,
                vmem_cap=96 << 20, two_step_cap=False)


def _sublane_align(*itemsizes):
    # Native sublane multiple per dtype: f32 -> 8, bf16 -> 16, int8 -> 32.
    return max(8 * max(1, 4 // int(i)) for i in itemsizes)


def _choose_row_block(nc, hw, x_isz, g_isz, p):
    """Sublane-aligned row tile sized for the HBM-bandwidth roofline."""
    sub = _sublane_align(x_isz, g_isz)
    row_bytes = hw * x_isz
    rows = max(sub, _round_down(p["target_bytes"] // row_bytes, sub))
    # Keep the pipeline fed with a few steps, but never drop below ~1 MiB/stream.
    rows_for_steps = max(sub, _round_up(pl.cdiv(nc, p["min_steps"]), sub))
    min_rows = max(sub, _round_down(p["min_bytes"] // row_bytes, sub))
    rows = min(rows, max(rows_for_steps, min_rows))
    # v7x: make sure both TensorCores get work when there is enough of it.
    if p["two_step_cap"] and nc >= 2 * sub:
        rows = min(rows, _round_up(pl.cdiv(nc, 2), sub))
    if rows >= nc:
        return nc            # single full-extent block (always layout-legal)
    return rows


def _vmem_limit(block_elems, x_isz, g_isz, cap):
    # 4 x.dtype streams (x, adv in; x_hat, new_adv out) + grad stream,
    # each double-buffered by the pipeline.
    need = 2 * (4 * block_elems * x_isz + block_elems * g_isz)
    return int(min(max(need + (4 << 20), 32 << 20), cap))


# ----------------------------------------------------------------------------
# NCHW (PyTorch layout): flatten to (N*C, H*W); lane axis = H*W.
# ----------------------------------------------------------------------------
@functools.partial(jax.jit, donate_argnames=("adv_noise",))
def advgni_perturb_nchw(x, grad_mask, adv_noise, eta, alpha):
    """x, adv_noise: (N, C, H, W); grad_mask: (N, C, H, W) in any sign-carrying dtype.

    Returns (x_hat, new_adv) in x.dtype.  eta/alpha are traced (SMEM) scalars,
    so different values never trigger a recompile.
    """
    N, C, H, W = x.shape
    NC, HW = N * C, H * W
    x_isz = jnp.dtype(x.dtype).itemsize
    g_isz = jnp.dtype(grad_mask.dtype).itemsize

    xf = x.reshape(NC, HW)           # contiguous reshapes: free, no HBM pass
    gf = grad_mask.reshape(NC, HW)
    af = adv_noise.reshape(NC, HW)

    eta32 = jnp.asarray(eta, jnp.float32)
    scal = jnp.stack([eta32, eta32 * jnp.asarray(alpha, jnp.float32)])

    p = _chip_params()
    row_blk = _choose_row_block(NC, HW, x_isz, g_isz, p)
    # Ragged last tile instead of pad/slice: OOB rows read garbage (per-row
    # min/max is unaffected) and OOB output rows are dropped.
    grid = (pl.cdiv(NC, row_blk),)

    spec = pl.BlockSpec((row_blk, HW), lambda i: (i, 0))
    scal_spec = pl.BlockSpec(memory_space=pltpu.MemorySpace.SMEM)

    vmem_limit = _vmem_limit(row_blk * HW, x_isz, g_isz, p["vmem_cap"])
    cost = pl.CostEstimate(flops=14 * NC * HW, transcendentals=0,
                           bytes_accessed=NC * HW * (4 * x_isz + g_isz))

    # TODO(synk): for H*W < 128 with NCHW data this layout hits masked partial
    # stores; prefer the NHWC variant below (or a packed segmented-reduce layout).
    kernel = functools.partial(_advgni_kernel, reduce_axis=-1)
    x_hat, new_adv = pl.pallas_call(
        kernel,
        out_shape=(jax.ShapeDtypeStruct((NC, HW), x.dtype),
                   jax.ShapeDtypeStruct((NC, HW), x.dtype)),
        grid_spec=pltpu.PrefetchScalarGridSpec(
            num_scalar_prefetch=0,
            grid=grid,
            in_specs=[scal_spec, spec, spec, spec],
            out_specs=(spec, spec)),
        input_output_aliases={3: 1},     # adv_noise (input) -> new_adv (output)
        compiler_params=pltpu.CompilerParams(
            dimension_semantics=("parallel",),
            vmem_limit_bytes=vmem_limit),
        cost_estimate=cost,
    )(scal, xf, gf, af)

    return x_hat.reshape(N, C, H, W), new_adv.reshape(N, C, H, W)


# ----------------------------------------------------------------------------
# NHWC (channels-last): flatten to (N, H*W, C); lane axis = C, spatial reduce on
# sublanes.  Recommended when H*W < 128 (late conv stages).
# ----------------------------------------------------------------------------
@functools.partial(jax.jit, donate_argnames=("adv_noise",))
def advgni_perturb_nhwc(x, grad_mask, adv_noise, eta, alpha):
    N, H, W, C = x.shape
    HW = H * W
    x_isz = jnp.dtype(x.dtype).itemsize
    g_isz = jnp.dtype(grad_mask.dtype).itemsize

    xf = x.reshape(N, HW, C)
    gf = grad_mask.reshape(N, HW, C)
    af = adv_noise.reshape(N, HW, C)

    eta32 = jnp.asarray(eta, jnp.float32)
    scal = jnp.stack([eta32, eta32 * jnp.asarray(alpha, jnp.float32)])

    p = _chip_params()
    slab = max(HW * C * x_isz, 1)            # one image per stream
    n_blk = max(1, min(N, p["target_bytes"] // slab))
    if p["two_step_cap"] and N >= 2:
        n_blk = min(n_blk, pl.cdiv(N, 2))    # keep both v7x TensorCores busy
    grid = (pl.cdiv(N, n_blk),)              # ragged last tile handled by Pallas

    spec = pl.BlockSpec((n_blk, HW, C), lambda i: (i, 0, 0))
    scal_spec = pl.BlockSpec(memory_space=pltpu.MemorySpace.SMEM)

    vmem_limit = _vmem_limit(n_blk * HW * C, x_isz, g_isz, p["vmem_cap"])
    cost = pl.CostEstimate(flops=14 * N * HW * C, transcendentals=0,
                           bytes_accessed=N * HW * C * (4 * x_isz + g_isz))

    kernel = functools.partial(_advgni_kernel, reduce_axis=1)
    x_hat, new_adv = pl.pallas_call(
        kernel,
        out_shape=(jax.ShapeDtypeStruct((N, HW, C), x.dtype),
                   jax.ShapeDtypeStruct((N, HW, C), x.dtype)),
        grid_spec=pltpu.PrefetchScalarGridSpec(
            num_scalar_prefetch=0,
            grid=grid,
            in_specs=[scal_spec, spec, spec, spec],
            out_specs=(spec, spec)),
        input_output_aliases={3: 1},
        compiler_params=pltpu.CompilerParams(
            dimension_semantics=("parallel",),
            vmem_limit_bytes=vmem_limit),
        cost_estimate=cost,
    )(scal, xf, gf, af)

    return x_hat.reshape(N, H, W, C), new_adv.reshape(N, H, W, C)


# ----------------------------------------------------------------------------
# Thin JAX wrapper mirroring HiddenPerturb.forward control flow (hidden module:
# input=False, normalize=False).  Only the advGNI add_adv path runs Pallas.
# ----------------------------------------------------------------------------
class HiddenPerturbJax:
    def __init__(self, architecture, eta, alpha_coeff=0.5, input=False,
                 normalize=False, data_format="NCHW"):
        self.architecture = architecture
        self.input = input
        self.alpha_coeff = float(alpha_coeff)
        self.normalize = normalize
        self.data_format = data_format
        # hidden-layer case: eta stays a scalar (the per-channel eta/std rescale
        # only applies to the image-space input=True, normalize=True variant).
        self.eta = float(eta)
        self.training = True
        self.adv_noise = None
        self._gni_key = jax.random.PRNGKey(1234)

    def __call__(self, x, grad_mask=None, add_adv=False, init_hidden=False):
        if not self.training:
            return x

        if self.architecture == 'GNI':
            # Plain-JAX elementwise branch; fresh noise per call.
            self._gni_key, sub = jax.random.split(self._gni_key)
            return x + jax.random.normal(sub, x.shape, x.dtype) * sqrt(0.001)

        if self.architecture in ('advGNI', 'advGNI_GA'):
            if init_hidden:
                self.adv_noise = jnp.zeros_like(x)
            if add_adv:
                assert grad_mask is not None
                fn = (advgni_perturb_nchw if self.data_format == "NCHW"
                      else advgni_perturb_nhwc)
                x_hat, new_adv = fn(x, grad_mask, self.adv_noise,
                                    self.eta, self.alpha_coeff)
                self.adv_noise = new_adv
                return x_hat
            return x

        # TODO(synk): FGSM / FGSM_RS are image-space (input=True) branches; with
        # input=False (hidden module) they reduce to identity, which is what we do.
        return x


# ----------------------------------------------------------------------------
# Pure-JAX reference of the advGNI branch (correctness check).
# ----------------------------------------------------------------------------
def _advgni_ref(x, grad_mask, adv_noise, eta, alpha, spatial_axes):
    sgn = jnp.sign(grad_mask.astype(jnp.float32)).astype(x.dtype)
    adv = adv_noise + sgn * (eta * alpha)
    adv = jnp.maximum(jnp.minimum(adv, eta), -eta)
    lower = jnp.min(x, axis=spatial_axes, keepdims=True)
    upper = jnp.max(x, axis=spatial_axes, keepdims=True)
    adv = jnp.maximum(jnp.minimum(adv, upper - x), lower - x)
    return x + adv, adv


if __name__ == "__main__":
    key = jax.random.PRNGKey(0)
    k1, k2, k3, k4 = jax.random.split(key, 4)

    # ---- 1) NCHW path (PyTorch layout), H*W = 256 >= 128, bf16 grad stream ----
    N, C, H, W = 2, 4, 16, 16
    x = jax.random.normal(k1, (N, C, H, W), jnp.float32)
    # Only sign(grad_mask) is consumed, so the gradient stream travels in bf16.
    # (f32 magnitudes below bf16's smallest subnormal would flush the sign to 0,
    #  irrelevant for adversarial gradients in practice.)
    grad = jax.random.normal(k2, (N, C, H, W), jnp.float32).astype(jnp.bfloat16)

    m = HiddenPerturbJax('advGNI', eta=8.0 / 255.0, alpha_coeff=0.5)
    _ = m(x, init_hidden=True)                       # adv_noise <- zeros
    x_hat = m(x, grad_mask=grad, add_adv=True)       # Pallas kernel
    x_hat = jax.block_until_ready(x_hat)

    ref_xhat, ref_adv = _advgni_ref(x, grad, jnp.zeros_like(x),
                                    m.eta, m.alpha_coeff, (2, 3))
    assert jnp.allclose(x_hat, ref_xhat, atol=1e-6, rtol=1e-6)
    assert jnp.allclose(m.adv_noise, ref_adv, atol=1e-6, rtol=1e-6)

    # ---- 2) NHWC path: H*W = 64 < 128, C = 256 on lanes, int8 sign stream ----
    N2, H2, W2, C2 = 2, 8, 8, 256
    x2 = jax.random.normal(k3, (N2, H2, W2, C2), jnp.float32)
    sgn_i8 = jnp.sign(
        jax.random.normal(k4, (N2, H2, W2, C2), jnp.float32)).astype(jnp.int8)

    m2 = HiddenPerturbJax('advGNI', eta=8.0 / 255.0, alpha_coeff=0.5,
                          data_format="NHWC")
    _ = m2(x2, init_hidden=True)
    x_hat2 = m2(x2, grad_mask=sgn_i8, add_adv=True)
    x_hat2 = jax.block_until_ready(x_hat2)

    ref_xhat2, ref_adv2 = _advgni_ref(x2, sgn_i8, jnp.zeros_like(x2),
                                      m2.eta, m2.alpha_coeff, (1, 2))
    assert jnp.allclose(x_hat2, ref_xhat2, atol=1e-6, rtol=1e-6)
    assert jnp.allclose(m2.adv_noise, ref_adv2, atol=1e-6, rtol=1e-6)

    print("KERNEL_OK")
</pallas_src>

<mosaic_0001>
module attributes {stable_mosaic.version = 11 : i64} {
  func.func @_advgni_kernel(%arg0: i32, %arg1: memref<2xf32, #tpu.memory_space<smem>>, %arg2: memref<8x256xf32, #tpu.memory_space<vmem>>, %arg3: memref<8x256xbf16, #tpu.memory_space<vmem>>, %arg4: memref<8x256xf32, #tpu.memory_space<vmem>>, %arg5: memref<8x256xf32, #tpu.memory_space<vmem>>, %arg6: memref<8x256xf32, #tpu.memory_space<vmem>>) attributes {dimension_semantics = [#tpu.dimension_semantics<parallel>], iteration_bounds = array<i64: 1>, scalar_prefetch = 0 : i64, scratch_operands = 0 : i64, tpu.core_type = #tpu.core_type<tc>, window_params = [{transform_indices = @transform_0, window_bounds = array<i64: 2>}, {transform_indices = @transform_1, window_bounds = array<i64: 8, 256>}, {transform_indices = @transform_2, window_bounds = array<i64: 8, 256>}, {transform_indices = @transform_3, window_bounds = array<i64: 8, 256>}, {transform_indices = @transform_4, window_bounds = array<i64: 8, 256>}, {transform_indices = @transform_5, window_bounds = array<i64: 8, 256>}]} {
    %c0 = arith.constant 0 : index
    %0 = memref.load %arg1[%c0] : memref<2xf32, #tpu.memory_space<smem>>
    %c1 = arith.constant 1 : index
    %1 = memref.load %arg1[%c1] : memref<2xf32, #tpu.memory_space<smem>>
    %c0_0 = arith.constant 0 : index
    %c0_1 = arith.constant 0 : index
    %2 = vector.load %arg2[%c0_0, %c0_1] : memref<8x256xf32, #tpu.memory_space<vmem>>, vector<8x256xf32>
    %c0_2 = arith.constant 0 : index
    %c0_3 = arith.constant 0 : index
    %3 = vector.load %arg3[%c0_2, %c0_3] : memref<8x256xbf16, #tpu.memory_space<vmem>>, vector<8x256xbf16>
    %c0_4 = arith.constant 0 : index
    %c0_5 = arith.constant 0 : index
    %4 = vector.load %arg4[%c0_4, %c0_5] : memref<8x256xf32, #tpu.memory_space<vmem>>, vector<8x256xf32>
    %cst = arith.constant 0.000000e+00 : bf16
    %5 = vector.broadcast %cst : bf16 to vector<8x256xbf16>
    %6 = arith.cmpf ogt, %3, %5 : vector<8x256xbf16>
    %7 = arith.extui %6 : vector<8x256xi1> to vector<8x256xi32>
    %8 = arith.sitofp %7 : vector<8x256xi32> to vector<8x256xf32>
    %cst_6 = arith.constant 0.000000e+00 : bf16
    %9 = vector.broadcast %cst_6 : bf16 to vector<8x256xbf16>
    %10 = arith.cmpf olt, %3, %9 : vector<8x256xbf16>
    %11 = arith.extui %10 : vector<8x256xi1> to vector<8x256xi32>
    %12 = arith.sitofp %11 : vector<8x256xi32> to vector<8x256xf32>
    %13 = arith.subf %8, %12 : vector<8x256xf32>
    %14 = vector.broadcast %1 : f32 to vector<8x256xf32>
    %15 = arith.mulf %13, %14 : vector<8x256xf32>
    %16 = arith.addf %4, %15 : vector<8x256xf32>
    %17 = vector.broadcast %0 : f32 to vector<8x256xf32>
    %18 = arith.minimumf %16, %17 : vector<8x256xf32>
    %cst_7 = arith.constant 0.000000e+00 : f32
    %19 = arith.subf %cst_7, %0 : f32
    %20 = vector.broadcast %19 : f32 to vector<8x256xf32>
    %21 = arith.maximumf %18, %20 : vector<8x256xf32>
    %cst_8 = arith.constant dense<0x7F800000> : vector<8xf32>
    %22 = vector.multi_reduction <minimumf>, %2, %cst_8 [1] : vector<8x256xf32> to vector<8xf32>
    %23 = vector.shape_cast %22 : vector<8xf32> to vector<8x1xf32>
    %cst_9 = arith.constant dense<0xFF800000> : vector<8xf32>
    %24 = vector.multi_reduction <maximumf>, %2, %cst_9 [1] : vector<8x256xf32> to vector<8xf32>
    %25 = vector.shape_cast %24 : vector<8xf32> to vector<8x1xf32>
    %26 = vector.broadcast %25 : vector<8x1xf32> to vector<8x256xf32>
    %27 = arith.subf %26, %2 : vector<8x256xf32>
    %28 = arith.minimumf %21, %27 : vector<8x256xf32>
    %29 = vector.broadcast %23 : vector<8x1xf32> to vector<8x256xf32>
    %30 = arith.subf %29, %2 : vector<8x256xf32>
    %31 = arith.maximumf %28, %30 : vector<8x256xf32>
    %c0_10 = arith.constant 0 : index
    %c0_11 = arith.constant 0 : index
    %32 = vector.load %arg6[%c0_10, %c0_11] : memref<8x256xf32, #tpu.memory_space<vmem>>, vector<8x256xf32>
    tpu.vector_store %arg6[%c0_10, %c0_11], %31 {strides = array<i32>} : memref<8x256xf32, #tpu.memory_space<vmem>>, vector<8x256xf32>,
    %33 = arith.addf %2, %31 : vector<8x256xf32>
    %c0_12 = arith.constant 0 : index
    %c0_13 = arith.constant 0 : index
    %34 = vector.load %arg5[%c0_12, %c0_13] : memref<8x256xf32, #tpu.memory_space<vmem>>, vector<8x256xf32>
    tpu.vector_store %arg5[%c0_12, %c0_13], %33 {strides = array<i32>} : memref<8x256xf32, #tpu.memory_space<vmem>>, vector<8x256xf32>,
    return
  }
  func.func @transform_0(%arg0: i32) -> i32 {
    %c0_i32 = arith.constant 0 : i32
    %c0_i32_0 = arith.constant 0 : i32
    return %c0_i32 : i32
  }
  func.func @transform_1(%arg0: i32) -> (i32, i32) {
    %c0_i32 = arith.constant 0 : i32
    %c0_i32_0 = arith.constant 0 : i32
    return %arg0, %c0_i32 : i32, i32
  }
  func.func @transform_2(%arg0: i32) -> (i32, i32) {
    %c0_i32 = arith.constant 0 : i32
    %c0_i32_0 = arith.constant 0 : i32
    return %arg0, %c0_i32 : i32, i32
  }
  func.func @transform_3(%arg0: i32) -> (i32, i32) {
    %c0_i32 = arith.constant 0 : i32
    %c0_i32_0 = arith.constant 0 : i32
    return %arg0, %c0_i32 : i32, i32
  }
  func.func @transform_4(%arg0: i32) -> (i32, i32) {
    %c0_i32 = arith.constant 0 : i32
    %c0_i32_0 = arith.constant 0 : i32
    return %arg0, %c0_i32 : i32, i32
  }
  func.func @transform_5(%arg0: i32) -> (i32, i32) {
    %c0_i32 = arith.constant 0 : i32
    %c0_i32_0 = arith.constant 0 : i32
    return %arg0, %c0_i32 : i32, i32
  }
}

</mosaic_0001>

<llo_original>
// kernel: advgni_perturb_nchw.1
$region0: #{advgni_perturb_nchw.1}
  #allocation0 [shape = 'u32[]', space=smem, size = 0x4, offset = 0x4, fixed_abs, tag = 'smem constant byte address 0x4 - core index']
  #allocation1 [shape = 'u32[144,128]{1,0:T(1,128)}', space=vmem, size = 0x12000, scoped, tag = 'internal scratch']
  %s0 = inlined_call_operand.vmem [shape: f32[2], index: 0, kind: input, shape index: {}]
  %s1 = inlined_call_operand.vmem [shape: f32[8,256], index: 1, kind: input, shape index: {}]
  %s2 = inlined_call_operand.vmem [shape: bf16[8,256], index: 2, kind: input, shape index: {}]
  %s3 = inlined_call_operand.vmem [shape: f32[8,256], index: 3, kind: input, shape index: {}, may-alias: {3,5}]
  %s4 = inlined_call_operand.vmem [shape: f32[8,256], index: 4, kind: output, shape index: {0}]
  %s5 = inlined_call_operand.vmem [shape: f32[8,256], index: 5, kind: output, shape index: {1}, may-alias: {3,5}]
  %6 = xla_tuple %s4, %s5
  %s7 = sld [smem:[#allocation0]]
  $region38: #{advgni_perturb_nchw.1} parent=0
    _
  %s9 = ssub.s32 1, %s7
  %s10 = scalar_select 0, %s9, %s7
  $region1: #{advgni_perturb_nchw.1} parent=0
    #allocation2 [shape = 'u8[512]{0}', space=smem, size = 0x200, scoped, tag = 'input window, operand 0, single buffered']
    #allocation3 [shape = 's32[1]{0}', space=sflag, size = 0x4, scoped, tag = 'scoped memory for advgni_perturb_nchw.1']
    %11 = vsyncpa [#allocation3], 0
    // Predicated region
    $region2: #{advgni_perturb_nchw.1} parent=1 // pred_check
      _
    $region3: #{advgni_perturb_nchw.1} parent=1 // pred_check_branch
      %13 = sbr.rel (0) target = $region5
    $region4: #{advgni_perturb_nchw.1} parent=1 // pred_region
      %s15 = ssub.s32 16, 16
      %16 = vsyncadd [#allocation3], %s15
      %s18 = sshll.u32 %s0, 4
      %s19 = int_to_ptr.vmem [resolvable:$true] %s18
      %21 = dma.vmem_to_smem %s19, 16, [#allocation2], [#allocation3]
    $region5: #{advgni_perturb_nchw.1} parent=1 // pred_fallthru
      _
    // Predicated region
    $region6: #{advgni_perturb_nchw.1} parent=1 // pred_check
      _
    $region7: #{advgni_perturb_nchw.1} parent=1 // pred_check_branch
      %23 = sbr.rel (0) target = $region9
    $region8: #{advgni_perturb_nchw.1} parent=1 // pred_region
      _
    $region9: #{advgni_perturb_nchw.1} parent=1 // pred_fallthru
      _
    // Predicated region
    $region10: #{advgni_perturb_nchw.1} parent=1 // pred_check
      _
    $region11: #{advgni_perturb_nchw.1} parent=1 // pred_check_branch
      %25 = sbr.rel (0) target = $region13
    $region12: #{advgni_perturb_nchw.1} parent=1 // pred_region
      _
    $region13: #{advgni_perturb_nchw.1} parent=1 // pred_fallthru
      _
    // Predicated region
    $region14: #{advgni_perturb_nchw.1} parent=1 // pred_check
      _
    $region15: #{advgni_perturb_nchw.1} parent=1 // pred_check_branch
      %27 = sbr.rel (0) target = $region17
    $region16: #{advgni_perturb_nchw.1} parent=1 // pred_region
      _
    $region17: #{advgni_perturb_nchw.1} parent=1 // pred_fallthru
      _
    // Predicated region
    $region18: #{advgni_perturb_nchw.1} parent=1 // pred_check
      _
    $region19: #{advgni_perturb_nchw.1} parent=1 // pred_check_branch
      %29 = sbr.rel (0) target = $region21
    $region20: #{advgni_perturb_nchw.1} parent=1 // pred_region
      %30 = dma.done [#allocation3], 16
    $region21: #{advgni_perturb_nchw.1} parent=1 // pred_fallthru
      _
    %31 = sfence
    %s35 = sld [smem:[#allocation2]]
    %s36 = sld [smem:[#allocation2 + $0x1]]
    %v37 = vld [vmem:[%s1] sm:$0xff]
    %v38 = vld [vmem:[%s1 + $0x8] sm:$0xff]
    %v39 = vld [vmem:[%s2] sm:$0xff]
    %v40 = vld [vmem:[%s3] sm:$0xff]
    %v41 = vld [vmem:[%s3 + $0x8] sm:$0xff]
    %vm42 = vcmp.gt.bf16.partialorder %v39, 0
    %v43 = vsel %vm42, 65537, 0
    %v44 = vunpack.c.l.b16 %v43
    %v45 = vunpack.c.h.b16 %v43
    %vm46 = vcmp.ne.s32.totalorder %v44, 0
    %vm47 = vcmp.ne.s32.totalorder %v45, 0
    %v48 = vsel %vm46, 1, 0
    %v49 = vsel %vm47, 1, 0
    %v50 = vcvt.s32.f32 %v48
    %v51 = vcvt.s32.f32 %v49
    %vm52 = vcmp.lt.bf16.partialorder %v39, 0
    %v53 = vsel %vm52, 65537, 0
    %v54 = vunpack.c.l.b16 %v53
    %v55 = vunpack.c.h.b16 %v53
    %vm56 = vcmp.ne.s32.totalorder %v54, 0
    %vm57 = vcmp.ne.s32.totalorder %v55, 0
    %v58 = vsel %vm56, 1, 0
    %v59 = vsel %vm57, 1, 0
    %v60 = vcvt.s32.f32 %v58
    %v61 = vcvt.s32.f32 %v59
    %v62 = vsub.f32 %v50, %v60
    %v63 = vsub.f32 %v51, %v61
    %v64 = vstv %s36
    %v65 = vmul.f32 %v62, %v64
    %v66 = vmul.f32 %v63, %v64
    %v67 = vadd.f32 %v40, %v65
    %v68 = vadd.f32 %v41, %v66
    %v69 = vstv %s35
    %v70 = vmin.f32 %v67, %v69
    %v71 = vmin.f32 %v68, %v69
    %s72 = ssub.f32 0.0, %s35
    %v73 = vstv %s72
    %v74 = vmax.f32 %v70, %v73
    %v75 = vmax.f32 %v71, %v73
    %v76 = vmin.f32 %v37, %v38
    %77 = vmin.xlane.f32.xlu0 %v76
    %v78 = vpop.xlane.xlu0 %77
    %v79 = vmax.f32 %v37, %v38
    %80 = vmax.xlane.f32.xlu0 %v79
    %v81 = vpop.xlane.xlu0 %80
    %v82 = vsub.f32 %v81, %v37
    %v83 = vsub.f32 %v81, %v38
    %v84 = vmin.f32 %v74, %v82
    %v85 = vmin.f32 %v75, %v83
    %v86 = vsub.f32 %v78, %v37
    %v87 = vsub.f32 %v78, %v38
    %v88 = vmax.f32 %v84, %v86
    %v89 = vmax.f32 %v85, %v87
    %90 = vst [vmem:[%s5] sm:$0xff] %v88
    %91 = vst [vmem:[%s5 + $0x8] sm:$0xff] %v89
    %v92 = vadd.f32 %v37, %v88
    %v93 = vadd.f32 %v38, %v89
    %94 = vst [vmem:[%s4] sm:$0xff] %v92
    %95 = vst [vmem:[%s4 + $0x8] sm:$0xff] %v93
    // Predicated region
    $region22: #{advgni_perturb_nchw.1} parent=1 // pred_check
      _
    $region23: #{advgni_perturb_nchw.1} parent=1 // pred_check_branch
      %97 = sbr.rel (0) target = $region25
    $region24: #{advgni_perturb_nchw.1} parent=1 // pred_region
      _
    $region25: #{advgni_perturb_nchw.1} parent=1 // pred_fallthru
      _
    // Predicated region
    $region26: #{advgni_perturb_nchw.1} parent=1 // pred_check
      _
    $region27: #{advgni_perturb_nchw.1} parent=1 // pred_check_branch
      %99 = sbr.rel (0) target = $region29
    $region28: #{advgni_perturb_nchw.1} parent=1 // pred_region
      _
    $region29: #{advgni_perturb_nchw.1} parent=1 // pred_fallthru
      _
    // Predicated region
    $region30: #{advgni_perturb_nchw.1} parent=1 // pred_check
      _
    $region31: #{advgni_perturb_nchw.1} parent=1 // pred_check_branch
      %101 = sbr.rel (0) target = $region33
    $region32: #{advgni_perturb_nchw.1} parent=1 // pred_region
      _
    $region33: #{advgni_perturb_nchw.1} parent=1 // pred_fallthru
      _
    // Predicated region
    $region34: #{advgni_perturb_nchw.1} parent=1 // pred_check
      _
    $region35: #{advgni_perturb_nchw.1} parent=1 // pred_check_branch
      %103 = sbr.rel (0) target = $region37
    $region36: #{advgni_perturb_nchw.1} parent=1 // pred_region
      _
    $region37: #{advgni_perturb_nchw.1} parent=1 // pred_fallthru
      _
    %104 = vsyncpa [#allocation3], 1

</llo_original>
